<compile_context>
chip_gen: v7x
topology: tpu7x:2x2x1
jax: 0.10.0
libtpu: 0.0.40
codegen_flags: <defaults>
</compile_context>

<pallas_src>
import functools

import jax
import jax.numpy as jnp
from jax.experimental import pallas as pl
from jax.experimental.pallas import tpu as pltpu


_VMEM = pl.BlockSpec(memory_space=pltpu.MemorySpace.VMEM)


# ---------------------------------------------------------------------------
# Fused kernel: whole VAE forward in one pallas_call
# ---------------------------------------------------------------------------

def _vae_fused_kernel(dm_ref, de_ref, dc_ref, eps_ref,
                      w1B_ref, w1A_ref, w1C_ref, p_enc_ref,
                      w_heads_ref, b_heads_ref,
                      w_dz_ref, p_dz_ref,
                      w4B_ref, w4A_ref, w4C_ref, b_dec_ref,
                      out_ref,
                      *, latent_dim, dim_1B, dim_1A, leaky_slope, bn_eps):
    """Inputs:
         dm/de/dc : (N, B_dim)/(N, A_dim)/(N, C_dim) raw omics data
         p_*      : packed per-channel BN params, rows = [gamma; beta], shape (2, C)
       Output:
         out_ref  : (N, 2L + L + B+A+C) = [mean | log_var | z | recon_B | recon_A | recon_C]
    """
    f32 = jnp.float32

    def bn_act(y, p):
        # BatchNorm1d (training-mode batch stats, biased var) -> LeakyReLU.
        # Linear bias omitted: it is exactly cancelled by the mean subtraction.
        mu = jnp.mean(y, axis=0, keepdims=True)
        d = y - mu                                    # reused for var and y_hat
        var = jnp.mean(d * d, axis=0, keepdims=True)
        scale = jax.lax.rsqrt(var + bn_eps) * p[0:1, :]   # gamma folded into scale
        y_hat = d * scale + p[1:2, :]
        return jnp.where(y_hat >= 0, y_hat, leaky_slope * y_hat)

    # ---- encode: three per-branch dots, concatenated in-register -> (N, cat)=[B|A|C]
    y_enc = jnp.concatenate(
        (jnp.dot(dm_ref[...], w1B_ref[...], preferred_element_type=f32),
         jnp.dot(de_ref[...], w1A_ref[...], preferred_element_type=f32),
         jnp.dot(dc_ref[...], w1C_ref[...], preferred_element_type=f32)),
        axis=1)
    level_3 = bn_act(y_enc, p_enc_ref[...])

    # ---- merged mean|log_var head: one MXU push -> (N, 2L)
    mlv = jnp.dot(level_3, w_heads_ref[...],
                  preferred_element_type=f32) + b_heads_ref[...]
    mean = mlv[:, :latent_dim]
    log_var = mlv[:, latent_dim:]

    # ---- reparameterize: z = eps * exp(0.5*log_var) + mean (EUP + VPU)
    z = eps_ref[...] * jnp.exp(0.5 * log_var) + mean

    # ---- decode trunk -> (N, cat)=[B|A|C]
    level_1 = bn_act(jnp.dot(z, w_dz_ref[...], preferred_element_type=f32),
                     p_dz_ref[...])

    # ---- three decoder heads, concatenated -> (N, B+A+C)=[recon_B|recon_A|recon_C]
    l1_B = level_1[:, :dim_1B]
    l1_A = level_1[:, dim_1B:dim_1B + dim_1A]
    l1_C = level_1[:, dim_1B + dim_1A:]
    recon = jnp.concatenate(
        (jnp.dot(l1_B, w4B_ref[...], preferred_element_type=f32),
         jnp.dot(l1_A, w4A_ref[...], preferred_element_type=f32),
         jnp.dot(l1_C, w4C_ref[...], preferred_element_type=f32)),
        axis=1) + b_dec_ref[...]

    # ---- single dense store of the fused output slab
    out_ref[...] = jnp.concatenate((mlv, z, recon), axis=1)


# ---------------------------------------------------------------------------
# Parameter construction (PyTorch-like init, packed for the fused kernel)
# ---------------------------------------------------------------------------

def _init_linear(key, din, dout, with_bias=True):
    """nn.Linear default init; weight stored pre-transposed as (din, dout)."""
    kw, kb = jax.random.split(key)
    bound = 1.0 / jnp.sqrt(jnp.float32(din))
    w = jax.random.uniform(kw, (din, dout), jnp.float32, -bound, bound)
    if not with_bias:
        return w
    b = jax.random.uniform(kb, (1, dout), jnp.float32, -bound, bound)
    return w, b


def init_vae_params(key, omics_dims, dim_1B, dim_1A, dim_1C, latent_dim):
    A_dim, B_dim, C_dim = omics_dims
    cat = dim_1B + dim_1A + dim_1C
    keys = jax.random.split(key, 9)

    # Linear layers immediately followed by BatchNorm: bias is mathematically dead
    # (cancelled by the batch-mean subtraction), so it is not created at all.
    w_1A = _init_linear(keys[0], A_dim, dim_1A, with_bias=False)
    w_1B = _init_linear(keys[1], B_dim, dim_1B, with_bias=False)
    w_1C = _init_linear(keys[2], C_dim, dim_1C, with_bias=False)
    w_mean, b_mean = _init_linear(keys[3], cat, latent_dim)
    w_logv, b_logv = _init_linear(keys[4], cat, latent_dim)
    w_dz = _init_linear(keys[5], latent_dim, cat, with_bias=False)
    w_4B, b_4B = _init_linear(keys[6], dim_1B, B_dim)
    w_4A, b_4A = _init_linear(keys[7], dim_1A, A_dim)
    w_4C, b_4C = _init_linear(keys[8], dim_1C, C_dim)

    ones = jnp.ones((1, cat), jnp.float32)
    zeros = jnp.zeros((1, cat), jnp.float32)
    p_enc = jnp.concatenate((ones, zeros), axis=0)         # [gamma; beta], (2, cat)
    p_dz = jnp.concatenate((ones, zeros), axis=0)          # [gamma; beta], (2, cat)

    w_heads = jnp.concatenate((w_mean, w_logv), axis=1)    # (cat, 2*latent)
    b_heads = jnp.concatenate((b_mean, b_logv), axis=1)    # (1, 2*latent)
    b_dec = jnp.concatenate((b_4B, b_4A, b_4C), axis=1)    # (1, B+A+C)

    return {
        'w_1B': w_1B, 'w_1A': w_1A, 'w_1C': w_1C, 'p_enc': p_enc,
        'w_heads': w_heads, 'b_heads': b_heads,
        'w_dz': w_dz, 'p_dz': p_dz,
        'w_4B': w_4B, 'w_4A': w_4A, 'w_4C': w_4C, 'b_dec': b_dec,
    }


# ---------------------------------------------------------------------------
# VaeBasicModel forward (one pallas_call)
# ---------------------------------------------------------------------------

def vae_basic_model_forward(params, data_e, data_m, data_c, eps_noise,
                            leaky_slope=0.2, bn_eps=1e-5):
    n = data_e.shape[0]
    A_dim, B_dim, C_dim = data_e.shape[1], data_m.shape[1], data_c.shape[1]
    latent_dim = eps_noise.shape[1]
    dim_1B = params['w_1B'].shape[1]
    dim_1A = params['w_1A'].shape[1]
    dout_tot = B_dim + A_dim + C_dim
    out_w = 3 * latent_dim + dout_tot     # [mean | log_var | z | recon_B|A|C]

    kern = functools.partial(_vae_fused_kernel,
                             latent_dim=latent_dim, dim_1B=dim_1B, dim_1A=dim_1A,
                             leaky_slope=leaky_slope, bn_eps=bn_eps)

    slab = pl.pallas_call(
        kern,
        out_shape=jax.ShapeDtypeStruct((n, out_w), jnp.float32),
        in_specs=[_VMEM] * 16,
        out_specs=_VMEM,
    )(data_m, data_e, data_c, eps_noise,
      params['w_1B'], params['w_1A'], params['w_1C'], params['p_enc'],
      params['w_heads'], params['b_heads'],
      params['w_dz'], params['p_dz'],
      params['w_4B'], params['w_4A'], params['w_4C'], params['b_dec'])

    # Split the fused output slab with cheap XLA slices.
    L = latent_dim
    mean = slab[:, 0:L]
    log_var = slab[:, L:2 * L]
    z = slab[:, 2 * L:3 * L]
    recon_B = slab[:, 3 * L:3 * L + B_dim]
    recon_A = slab[:, 3 * L + B_dim:3 * L + B_dim + A_dim]
    recon_C = slab[:, 3 * L + B_dim + A_dim:]

    latent = jax.lax.stop_gradient(mean)       # mean.detach()
    return z, [recon_A, recon_B, recon_C], mean, log_var, latent


# ---------------------------------------------------------------------------
# Pure-JAX reference (same packed params) for a loose numerical sanity check
# ---------------------------------------------------------------------------

def vae_reference(params, data_e, data_m, data_c, eps_noise,
                  leaky_slope=0.2, bn_eps=1e-5):
    def bn_act(y, p):
        mu = jnp.mean(y, axis=0, keepdims=True)
        d = y - mu
        var = jnp.mean(d * d, axis=0, keepdims=True)
        y_hat = d * jax.lax.rsqrt(var + bn_eps) * p[0:1, :] + p[1:2, :]
        return jnp.where(y_hat >= 0, y_hat, leaky_slope * y_hat)

    L = eps_noise.shape[1]
    B_dim, A_dim = data_m.shape[1], data_e.shape[1]
    dim_1B = params['w_1B'].shape[1]
    dim_1A = params['w_1A'].shape[1]

    y_enc = jnp.concatenate((data_m @ params['w_1B'],
                             data_e @ params['w_1A'],
                             data_c @ params['w_1C']), axis=1)
    level_3 = bn_act(y_enc, params['p_enc'])
    mlv = level_3 @ params['w_heads'] + params['b_heads']
    mean, log_var = mlv[:, :L], mlv[:, L:]
    z = eps_noise * jnp.exp(0.5 * log_var) + mean
    level_1 = bn_act(z @ params['w_dz'], params['p_dz'])
    recon = jnp.concatenate(
        (level_1[:, :dim_1B] @ params['w_4B'],
         level_1[:, dim_1B:dim_1B + dim_1A] @ params['w_4A'],
         level_1[:, dim_1B + dim_1A:] @ params['w_4C']), axis=1) + params['b_dec']
    recon_B = recon[:, :B_dim]
    recon_A = recon[:, B_dim:B_dim + A_dim]
    recon_C = recon[:, B_dim + A_dim:]
    return z, [recon_A, recon_B, recon_C], mean, log_var, jax.lax.stop_gradient(mean)


# ---------------------------------------------------------------------------
# main
# ---------------------------------------------------------------------------

if __name__ == "__main__":
    # Small shapes consistent with the module's forward (three omics vectors).
    batch = 8                       # sublane-native (multiple of 8)
    A_dim, B_dim, C_dim = 16, 24, 20
    dim_1A = dim_1B = dim_1C = 32
    latent_dim = 16

    key = jax.random.PRNGKey(0)
    k_params, k_e, k_m, k_c, k_eps = jax.random.split(key, 5)

    params = init_vae_params(k_params, (A_dim, B_dim, C_dim),
                             dim_1B, dim_1A, dim_1C, latent_dim)

    data_e = jax.random.normal(k_e, (batch, A_dim), jnp.float32)
    data_m = jax.random.normal(k_m, (batch, B_dim), jnp.float32)
    data_c = jax.random.normal(k_c, (batch, C_dim), jnp.float32)
    # eps ~ N(0,1) for the reparameterization trick (torch.randn_like equivalent)
    eps_noise = jax.random.normal(k_eps, (batch, latent_dim), jnp.float32)

    fwd = jax.jit(vae_basic_model_forward)
    z, recon, mean, log_var, latent = fwd(params, data_e, data_m, data_c, eps_noise)
    jax.block_until_ready((z, recon, mean, log_var, latent))

    # Shape sanity checks.
    assert z.shape == (batch, latent_dim)
    assert mean.shape == (batch, latent_dim)
    assert log_var.shape == (batch, latent_dim)
    assert latent.shape == (batch, latent_dim)
    assert recon[0].shape == (batch, A_dim)
    assert recon[1].shape == (batch, B_dim)
    assert recon[2].shape == (batch, C_dim)
    assert bool(jnp.all(jnp.isfinite(z)))
    assert bool(jnp.all(jnp.isfinite(recon[0])))

    # Numerical sanity check vs. a pure-JAX reference (loose tolerance: default
    # TPU MXU matmul precision differs slightly from the XLA reference path).
    z_r, recon_r, mean_r, logv_r, _ = vae_reference(params, data_e, data_m,
                                                    data_c, eps_noise)
    ok = lambda a, b: bool(jnp.allclose(a, b, rtol=5e-2, atol=5e-2))
    assert ok(mean, mean_r)
    assert ok(log_var, logv_r)
    assert ok(z, z_r)
    assert ok(recon[0], recon_r[0])
    assert ok(recon[1], recon_r[1])
    assert ok(recon[2], recon_r[2])

    print("KERNEL_OK")
</pallas_src>

<mosaic_0001>
module attributes {stable_mosaic.version = 11 : i64} {
  func.func @_vae_fused_kernel(%arg0: memref<8x24xf32, #tpu.memory_space<vmem>>, %arg1: memref<8x16xf32, #tpu.memory_space<vmem>>, %arg2: memref<8x20xf32, #tpu.memory_space<vmem>>, %arg3: memref<8x16xf32, #tpu.memory_space<vmem>>, %arg4: memref<24x32xf32, #tpu.memory_space<vmem>>, %arg5: memref<16x32xf32, #tpu.memory_space<vmem>>, %arg6: memref<20x32xf32, #tpu.memory_space<vmem>>, %arg7: memref<2x96xf32, #tpu.memory_space<vmem>>, %arg8: memref<96x32xf32, #tpu.memory_space<vmem>>, %arg9: memref<1x32xf32, #tpu.memory_space<vmem>>, %arg10: memref<16x96xf32, #tpu.memory_space<vmem>>, %arg11: memref<2x96xf32, #tpu.memory_space<vmem>>, %arg12: memref<32x24xf32, #tpu.memory_space<vmem>>, %arg13: memref<32x16xf32, #tpu.memory_space<vmem>>, %arg14: memref<32x20xf32, #tpu.memory_space<vmem>>, %arg15: memref<1x60xf32, #tpu.memory_space<vmem>>, %arg16: memref<8x108xf32, #tpu.memory_space<vmem>>) attributes {dimension_semantics = [], scalar_prefetch = 0 : i64, scratch_operands = 0 : i64, tpu.core_type = #tpu.core_type<tc>} {
    %c0 = arith.constant 0 : index
    %c0_0 = arith.constant 0 : index
    %0 = vector.load %arg0[%c0, %c0_0] : memref<8x24xf32, #tpu.memory_space<vmem>>, vector<8x24xf32>
    %c0_1 = arith.constant 0 : index
    %c0_2 = arith.constant 0 : index
    %1 = vector.load %arg4[%c0_1, %c0_2] : memref<24x32xf32, #tpu.memory_space<vmem>>, vector<24x32xf32>
    %cst = arith.constant dense<0.000000e+00> : vector<8x32xf32>
    %2 = tpu.matmul %0, %1, %cst {dimension_numbers = #tpu.dot_dimension_numbers<[1], [0], [0], [1], [0, 0, 1, 1], [], []>} : vector<8x24xf32>, vector<24x32xf32>, vector<8x32xf32> -> vector<8x32xf32>
    %c0_3 = arith.constant 0 : index
    %c0_4 = arith.constant 0 : index
    %3 = vector.load %arg1[%c0_3, %c0_4] : memref<8x16xf32, #tpu.memory_space<vmem>>, vector<8x16xf32>
    %c0_5 = arith.constant 0 : index
    %c0_6 = arith.constant 0 : index
    %4 = vector.load %arg5[%c0_5, %c0_6] : memref<16x32xf32, #tpu.memory_space<vmem>>, vector<16x32xf32>
    %cst_7 = arith.constant dense<0.000000e+00> : vector<8x32xf32>
    %5 = tpu.matmul %3, %4, %cst_7 {dimension_numbers = #tpu.dot_dimension_numbers<[1], [0], [0], [1], [0, 0, 1, 1], [], []>} : vector<8x16xf32>, vector<16x32xf32>, vector<8x32xf32> -> vector<8x32xf32>
    %c0_8 = arith.constant 0 : index
    %c0_9 = arith.constant 0 : index
    %6 = vector.load %arg2[%c0_8, %c0_9] : memref<8x20xf32, #tpu.memory_space<vmem>>, vector<8x20xf32>
    %c0_10 = arith.constant 0 : index
    %c0_11 = arith.constant 0 : index
    %7 = vector.load %arg6[%c0_10, %c0_11] : memref<20x32xf32, #tpu.memory_space<vmem>>, vector<20x32xf32>
    %cst_12 = arith.constant dense<0.000000e+00> : vector<8x32xf32>
    %8 = tpu.matmul %6, %7, %cst_12 {dimension_numbers = #tpu.dot_dimension_numbers<[1], [0], [0], [1], [0, 0, 1, 1], [], []>} : vector<8x20xf32>, vector<20x32xf32>, vector<8x32xf32> -> vector<8x32xf32>
    %9 = tpu.concatenate %2, %5, %8 in 1 : vector<8x32xf32>, vector<8x32xf32>, vector<8x32xf32> -> vector<8x96xf32>
    %c0_13 = arith.constant 0 : index
    %c0_14 = arith.constant 0 : index
    %10 = vector.load %arg7[%c0_13, %c0_14] : memref<2x96xf32, #tpu.memory_space<vmem>>, vector<2x96xf32>
    %cst_15 = arith.constant dense<0.000000e+00> : vector<96xf32>
    %11 = vector.multi_reduction <add>, %9, %cst_15 [0] : vector<8x96xf32> to vector<96xf32>
    %12 = vector.shape_cast %11 : vector<96xf32> to vector<1x96xf32>
    %cst_16 = arith.constant 8.000000e+00 : f32
    %13 = vector.broadcast %cst_16 : f32 to vector<1x96xf32>
    %14 = arith.divf %12, %13 : vector<1x96xf32>
    %15 = vector.broadcast %14 : vector<1x96xf32> to vector<8x96xf32>
    %16 = arith.subf %9, %15 : vector<8x96xf32>
    %17 = arith.mulf %16, %16 : vector<8x96xf32>
    %cst_17 = arith.constant dense<0.000000e+00> : vector<96xf32>
    %18 = vector.multi_reduction <add>, %17, %cst_17 [0] : vector<8x96xf32> to vector<96xf32>
    %19 = vector.shape_cast %18 : vector<96xf32> to vector<1x96xf32>
    %cst_18 = arith.constant 8.000000e+00 : f32
    %20 = vector.broadcast %cst_18 : f32 to vector<1x96xf32>
    %21 = arith.divf %19, %20 : vector<1x96xf32>
    %cst_19 = arith.constant 9.99999974E-6 : f32
    %22 = vector.broadcast %cst_19 : f32 to vector<1x96xf32>
    %23 = arith.addf %21, %22 : vector<1x96xf32>
    %24 = math.rsqrt %23 : vector<1x96xf32>
    %25 = vector.extract_strided_slice %10 {offsets = [0, 0], sizes = [1, 96], strides = [1, 1]} : vector<2x96xf32> to vector<1x96xf32>
    %26 = arith.mulf %24, %25 : vector<1x96xf32>
    %27 = vector.broadcast %26 : vector<1x96xf32> to vector<8x96xf32>
    %28 = arith.mulf %16, %27 : vector<8x96xf32>
    %29 = vector.extract_strided_slice %10 {offsets = [1, 0], sizes = [1, 96], strides = [1, 1]} : vector<2x96xf32> to vector<1x96xf32>
    %30 = vector.broadcast %29 : vector<1x96xf32> to vector<8x96xf32>
    %31 = arith.addf %28, %30 : vector<8x96xf32>
    %cst_20 = arith.constant 0.000000e+00 : f32
    %32 = vector.broadcast %cst_20 : f32 to vector<8x96xf32>
    %33 = arith.cmpf oge, %31, %32 : vector<8x96xf32>
    %cst_21 = arith.constant 2.000000e-01 : f32
    %34 = vector.broadcast %cst_21 : f32 to vector<8x96xf32>
    %35 = arith.mulf %34, %31 : vector<8x96xf32>
    %36 = arith.select %33, %31, %35 : vector<8x96xi1>, vector<8x96xf32>
    %c0_22 = arith.constant 0 : index
    %c0_23 = arith.constant 0 : index
    %37 = vector.load %arg8[%c0_22, %c0_23] : memref<96x32xf32, #tpu.memory_space<vmem>>, vector<96x32xf32>
    %cst_24 = arith.constant dense<0.000000e+00> : vector<8x32xf32>
    %38 = tpu.matmul %36, %37, %cst_24 {dimension_numbers = #tpu.dot_dimension_numbers<[1], [0], [0], [1], [0, 0, 1, 1], [], []>} : vector<8x96xf32>, vector<96x32xf32>, vector<8x32xf32> -> vector<8x32xf32>
    %c0_25 = arith.constant 0 : index
    %c0_26 = arith.constant 0 : index
    %39 = vector.load %arg9[%c0_25, %c0_26] : memref<1x32xf32, #tpu.memory_space<vmem>>, vector<1x32xf32>
    %40 = vector.broadcast %39 : vector<1x32xf32> to vector<8x32xf32>
    %41 = arith.addf %38, %40 : vector<8x32xf32>
    %42 = vector.extract_strided_slice %41 {offsets = [0, 0], sizes = [8, 16], strides = [1, 1]} : vector<8x32xf32> to vector<8x16xf32>
    %43 = vector.extract_strided_slice %41 {offsets = [0, 16], sizes = [8, 16], strides = [1, 1]} : vector<8x32xf32> to vector<8x16xf32>
    %c0_27 = arith.constant 0 : index
    %c0_28 = arith.constant 0 : index
    %44 = vector.load %arg3[%c0_27, %c0_28] : memref<8x16xf32, #tpu.memory_space<vmem>>, vector<8x16xf32>
    %cst_29 = arith.constant 5.000000e-01 : f32
    %45 = vector.broadcast %cst_29 : f32 to vector<8x16xf32>
    %46 = arith.mulf %45, %43 : vector<8x16xf32>
    %47 = math.exp %46 : vector<8x16xf32>
    %48 = arith.mulf %44, %47 : vector<8x16xf32>
    %49 = arith.addf %48, %42 : vector<8x16xf32>
    %c0_30 = arith.constant 0 : index
    %c0_31 = arith.constant 0 : index
    %50 = vector.load %arg10[%c0_30, %c0_31] : memref<16x96xf32, #tpu.memory_space<vmem>>, vector<16x96xf32>
    %cst_32 = arith.constant dense<0.000000e+00> : vector<8x96xf32>
    %51 = tpu.matmul %49, %50, %cst_32 {dimension_numbers = #tpu.dot_dimension_numbers<[1], [0], [0], [1], [0, 0, 1, 1], [], []>} : vector<8x16xf32>, vector<16x96xf32>, vector<8x96xf32> -> vector<8x96xf32>
    %c0_33 = arith.constant 0 : index
    %c0_34 = arith.constant 0 : index
    %52 = vector.load %arg11[%c0_33, %c0_34] : memref<2x96xf32, #tpu.memory_space<vmem>>, vector<2x96xf32>
    %cst_35 = arith.constant dense<0.000000e+00> : vector<96xf32>
    %53 = vector.multi_reduction <add>, %51, %cst_35 [0] : vector<8x96xf32> to vector<96xf32>
    %54 = vector.shape_cast %53 : vector<96xf32> to vector<1x96xf32>
    %cst_36 = arith.constant 8.000000e+00 : f32
    %55 = vector.broadcast %cst_36 : f32 to vector<1x96xf32>
    %56 = arith.divf %54, %55 : vector<1x96xf32>
    %57 = vector.broadcast %56 : vector<1x96xf32> to vector<8x96xf32>
    %58 = arith.subf %51, %57 : vector<8x96xf32>
    %59 = arith.mulf %58, %58 : vector<8x96xf32>
    %cst_37 = arith.constant dense<0.000000e+00> : vector<96xf32>
    %60 = vector.multi_reduction <add>, %59, %cst_37 [0] : vector<8x96xf32> to vector<96xf32>
    %61 = vector.shape_cast %60 : vector<96xf32> to vector<1x96xf32>
    %cst_38 = arith.constant 8.000000e+00 : f32
    %62 = vector.broadcast %cst_38 : f32 to vector<1x96xf32>
    %63 = arith.divf %61, %62 : vector<1x96xf32>
    %cst_39 = arith.constant 9.99999974E-6 : f32
    %64 = vector.broadcast %cst_39 : f32 to vector<1x96xf32>
    %65 = arith.addf %63, %64 : vector<1x96xf32>
    %66 = math.rsqrt %65 : vector<1x96xf32>
    %67 = vector.extract_strided_slice %52 {offsets = [0, 0], sizes = [1, 96], strides = [1, 1]} : vector<2x96xf32> to vector<1x96xf32>
    %68 = arith.mulf %66, %67 : vector<1x96xf32>
    %69 = vector.broadcast %68 : vector<1x96xf32> to vector<8x96xf32>
    %70 = arith.mulf %58, %69 : vector<8x96xf32>
    %71 = vector.extract_strided_slice %52 {offsets = [1, 0], sizes = [1, 96], strides = [1, 1]} : vector<2x96xf32> to vector<1x96xf32>
    %72 = vector.broadcast %71 : vector<1x96xf32> to vector<8x96xf32>
    %73 = arith.addf %70, %72 : vector<8x96xf32>
    %cst_40 = arith.constant 0.000000e+00 : f32
    %74 = vector.broadcast %cst_40 : f32 to vector<8x96xf32>
    %75 = arith.cmpf oge, %73, %74 : vector<8x96xf32>
    %cst_41 = arith.constant 2.000000e-01 : f32
    %76 = vector.broadcast %cst_41 : f32 to vector<8x96xf32>
    %77 = arith.mulf %76, %73 : vector<8x96xf32>
    %78 = arith.select %75, %73, %77 : vector<8x96xi1>, vector<8x96xf32>
    %79 = vector.extract_strided_slice %78 {offsets = [0, 0], sizes = [8, 32], strides = [1, 1]} : vector<8x96xf32> to vector<8x32xf32>
    %80 = vector.extract_strided_slice %78 {offsets = [0, 32], sizes = [8, 32], strides = [1, 1]} : vector<8x96xf32> to vector<8x32xf32>
    %81 = vector.extract_strided_slice %78 {offsets = [0, 64], sizes = [8, 32], strides = [1, 1]} : vector<8x96xf32> to vector<8x32xf32>
    %c0_42 = arith.constant 0 : index
    %c0_43 = arith.constant 0 : index
    %82 = vector.load %arg12[%c0_42, %c0_43] : memref<32x24xf32, #tpu.memory_space<vmem>>, vector<32x24xf32>
    %cst_44 = arith.constant dense<0.000000e+00> : vector<8x24xf32>
    %83 = tpu.matmul %79, %82, %cst_44 {dimension_numbers = #tpu.dot_dimension_numbers<[1], [0], [0], [1], [0, 0, 1, 1], [], []>} : vector<8x32xf32>, vector<32x24xf32>, vector<8x24xf32> -> vector<8x24xf32>
    %c0_45 = arith.constant 0 : index
    %c0_46 = arith.constant 0 : index
    %84 = vector.load %arg13[%c0_45, %c0_46] : memref<32x16xf32, #tpu.memory_space<vmem>>, vector<32x16xf32>
    %cst_47 = arith.constant dense<0.000000e+00> : vector<8x16xf32>
    %85 = tpu.matmul %80, %84, %cst_47 {dimension_numbers = #tpu.dot_dimension_numbers<[1], [0], [0], [1], [0, 0, 1, 1], [], []>} : vector<8x32xf32>, vector<32x16xf32>, vector<8x16xf32> -> vector<8x16xf32>
    %c0_48 = arith.constant 0 : index
    %c0_49 = arith.constant 0 : index
    %86 = vector.load %arg14[%c0_48, %c0_49] : memref<32x20xf32, #tpu.memory_space<vmem>>, vector<32x20xf32>
    %cst_50 = arith.constant dense<0.000000e+00> : vector<8x20xf32>
    %87 = tpu.matmul %81, %86, %cst_50 {dimension_numbers = #tpu.dot_dimension_numbers<[1], [0], [0], [1], [0, 0, 1, 1], [], []>} : vector<8x32xf32>, vector<32x20xf32>, vector<8x20xf32> -> vector<8x20xf32>
    %88 = tpu.concatenate %83, %85, %87 in 1 : vector<8x24xf32>, vector<8x16xf32>, vector<8x20xf32> -> vector<8x60xf32>
    %c0_51 = arith.constant 0 : index
    %c0_52 = arith.constant 0 : index
    %89 = vector.load %arg15[%c0_51, %c0_52] : memref<1x60xf32, #tpu.memory_space<vmem>>, vector<1x60xf32>
    %90 = vector.broadcast %89 : vector<1x60xf32> to vector<8x60xf32>
    %91 = arith.addf %88, %90 : vector<8x60xf32>
    %92 = tpu.concatenate %41, %49, %91 in 1 : vector<8x32xf32>, vector<8x16xf32>, vector<8x60xf32> -> vector<8x108xf32>
    %c0_53 = arith.constant 0 : index
    %c0_54 = arith.constant 0 : index
    %93 = vector.load %arg16[%c0_53, %c0_54] : memref<8x108xf32, #tpu.memory_space<vmem>>, vector<8x108xf32>
    tpu.vector_store %arg16[%c0_53, %c0_54], %92 {strides = array<i32>} : memref<8x108xf32, #tpu.memory_space<vmem>>, vector<8x108xf32>,
    return
  }
}

</mosaic_0001>

<llo_original>
// kernel: vae_basic_model_forward.1
$region0: #{vae_basic_model_forward.1}
  #allocation0 [shape = 'u32[]', space=smem, size = 0x4, offset = 0x4, fixed_abs, tag = 'smem constant byte address 0x4 - core index']
  #allocation1 [shape = 'u32[144,128]{1,0:T(1,128)}', space=vmem, size = 0x12000, scoped, tag = 'internal scratch']
  %s0 = inlined_call_operand.vmem [shape: f32[8,24], index: 0, kind: input, shape index: {}]
  %s1 = inlined_call_operand.vmem [shape: f32[8,16], index: 1, kind: input, shape index: {}]
  %s2 = inlined_call_operand.vmem [shape: f32[8,20], index: 2, kind: input, shape index: {}]
  %s3 = inlined_call_operand.vmem [shape: f32[8,16], index: 3, kind: input, shape index: {}]
  %s4 = inlined_call_operand.vmem [shape: f32[24,32], index: 4, kind: input, shape index: {}]
  %s5 = inlined_call_operand.vmem [shape: f32[16,32], index: 5, kind: input, shape index: {}]
  %s6 = inlined_call_operand.vmem [shape: f32[20,32], index: 6, kind: input, shape index: {}]
  %s7 = inlined_call_operand.vmem [shape: f32[2,96], index: 7, kind: input, shape index: {}]
  %s8 = inlined_call_operand.vmem [shape: f32[96,32], index: 8, kind: input, shape index: {}]
  %s9 = inlined_call_operand.vmem [shape: f32[1,32], index: 9, kind: input, shape index: {}]
  %s10 = inlined_call_operand.vmem [shape: f32[16,96], index: 10, kind: input, shape index: {}]
  %s11 = inlined_call_operand.vmem [shape: f32[2,96], index: 11, kind: input, shape index: {}]
  %s12 = inlined_call_operand.vmem [shape: f32[32,24], index: 12, kind: input, shape index: {}]
  %s13 = inlined_call_operand.vmem [shape: f32[32,16], index: 13, kind: input, shape index: {}]
  %s14 = inlined_call_operand.vmem [shape: f32[32,20], index: 14, kind: input, shape index: {}]
  %s15 = inlined_call_operand.vmem [shape: f32[1,60], index: 15, kind: input, shape index: {}]
  %s16 = inlined_call_operand.vmem [shape: f32[8,108], index: 16, kind: output, shape index: {}]
  %s17 = sld [smem:[#allocation0]]
  $region74: #{vae_basic_model_forward.1} parent=0
    _
  %s19 = ssub.s32 1, %s17
  %s20 = scalar_select 0, %s19, %s17
  // Predicated region
  $region2: #{vae_basic_model_forward.1} parent=0 // pred_check
    _
  $region3: #{vae_basic_model_forward.1} parent=0 // pred_check_branch
    %22 = sbr.rel (0) target = $region5
  $region4: #{vae_basic_model_forward.1} parent=0 // pred_region
    _
  $region5: #{vae_basic_model_forward.1} parent=0 // pred_fallthru
    _
  // Predicated region
  $region6: #{vae_basic_model_forward.1} parent=0 // pred_check
    _
  $region7: #{vae_basic_model_forward.1} parent=0 // pred_check_branch
    %24 = sbr.rel (0) target = $region9
  $region8: #{vae_basic_model_forward.1} parent=0 // pred_region
    _
  $region9: #{vae_basic_model_forward.1} parent=0 // pred_fallthru
    _
  // Predicated region
  $region10: #{vae_basic_model_forward.1} parent=0 // pred_check
    _
  $region11: #{vae_basic_model_forward.1} parent=0 // pred_check_branch
    %26 = sbr.rel (0) target = $region13
  $region12: #{vae_basic_model_forward.1} parent=0 // pred_region
    _
  $region13: #{vae_basic_model_forward.1} parent=0 // pred_fallthru
    _
  // Predicated region
  $region14: #{vae_basic_model_forward.1} parent=0 // pred_check
    _
  $region15: #{vae_basic_model_forward.1} parent=0 // pred_check_branch
    %28 = sbr.rel (0) target = $region17
  $region16: #{vae_basic_model_forward.1} parent=0 // pred_region
    _
  $region17: #{vae_basic_model_forward.1} parent=0 // pred_fallthru
    _
  // Predicated region
  $region18: #{vae_basic_model_forward.1} parent=0 // pred_check
    _
  $region19: #{vae_basic_model_forward.1} parent=0 // pred_check_branch
    %30 = sbr.rel (0) target = $region21
  $region20: #{vae_basic_model_forward.1} parent=0 // pred_region
    _
  $region21: #{vae_basic_model_forward.1} parent=0 // pred_fallthru
    _
  // Predicated region
  $region22: #{vae_basic_model_forward.1} parent=0 // pred_check
    _
  $region23: #{vae_basic_model_forward.1} parent=0 // pred_check_branch
    %32 = sbr.rel (0) target = $region25
  $region24: #{vae_basic_model_forward.1} parent=0 // pred_region
    _
  $region25: #{vae_basic_model_forward.1} parent=0 // pred_fallthru
    _
  // Predicated region
  $region26: #{vae_basic_model_forward.1} parent=0 // pred_check
    _
  $region27: #{vae_basic_model_forward.1} parent=0 // pred_check_branch
    %34 = sbr.rel (0) target = $region29
  $region28: #{vae_basic_model_forward.1} parent=0 // pred_region
    _
  $region29: #{vae_basic_model_forward.1} parent=0 // pred_fallthru
    _
  // Predicated region
  $region30: #{vae_basic_model_forward.1} parent=0 // pred_check
    _
  $region31: #{vae_basic_model_forward.1} parent=0 // pred_check_branch
    %36 = sbr.rel (0) target = $region33
  $region32: #{vae_basic_model_forward.1} parent=0 // pred_region
    _
  $region33: #{vae_basic_model_forward.1} parent=0 // pred_fallthru
    _
  // Predicated region
  $region34: #{vae_basic_model_forward.1} parent=0 // pred_check
    _
  $region35: #{vae_basic_model_forward.1} parent=0 // pred_check_branch
    %38 = sbr.rel (0) target = $region37
  $region36: #{vae_basic_model_forward.1} parent=0 // pred_region
    _
  $region37: #{vae_basic_model_forward.1} parent=0 // pred_fallthru
    _
  // Predicated region
  $region38: #{vae_basic_model_forward.1} parent=0 // pred_check
    _
  $region39: #{vae_basic_model_forward.1} parent=0 // pred_check_branch
    %40 = sbr.rel (0) target = $region41
  $region40: #{vae_basic_model_forward.1} parent=0 // pred_region
    _
  $region41: #{vae_basic_model_forward.1} parent=0 // pred_fallthru
    _
  // Predicated region
  $region42: #{vae_basic_model_forward.1} parent=0 // pred_check
    _
  $region43: #{vae_basic_model_forward.1} parent=0 // pred_check_branch
    %42 = sbr.rel (0) target = $region45
  $region44: #{vae_basic_model_forward.1} parent=0 // pred_region
    _
  $region45: #{vae_basic_model_forward.1} parent=0 // pred_fallthru
    _
  // Predicated region
  $region46: #{vae_basic_model_forward.1} parent=0 // pred_check
    _
  $region47: #{vae_basic_model_forward.1} parent=0 // pred_check_branch
    %44 = sbr.rel (0) target = $region49
  $region48: #{vae_basic_model_forward.1} parent=0 // pred_region
    _
  $region49: #{vae_basic_model_forward.1} parent=0 // pred_fallthru
    _
  // Predicated region
  $region50: #{vae_basic_model_forward.1} parent=0 // pred_check
    _
  $region51: #{vae_basic_model_forward.1} parent=0 // pred_check_branch
    %46 = sbr.rel (0) target = $region53
  $region52: #{vae_basic_model_forward.1} parent=0 // pred_region
    _
  $region53: #{vae_basic_model_forward.1} parent=0 // pred_fallthru
    _
  // Predicated region
  $region54: #{vae_basic_model_forward.1} parent=0 // pred_check
    _
  $region55: #{vae_basic_model_forward.1} parent=0 // pred_check_branch
    %48 = sbr.rel (0) target = $region57
  $region56: #{vae_basic_model_forward.1} parent=0 // pred_region
    _
  $region57: #{vae_basic_model_forward.1} parent=0 // pred_fallthru
    _
  // Predicated region
  $region58: #{vae_basic_model_forward.1} parent=0 // pred_check
    _
  $region59: #{vae_basic_model_forward.1} parent=0 // pred_check_branch
    %50 = sbr.rel (0) target = $region61
  $region60: #{vae_basic_model_forward.1} parent=0 // pred_region
    _
  $region61: #{vae_basic_model_forward.1} parent=0 // pred_fallthru
    _
  // Predicated region
  $region62: #{vae_basic_model_forward.1} parent=0 // pred_check
    _
  $region63: #{vae_basic_model_forward.1} parent=0 // pred_check_branch
    %52 = sbr.rel (0) target = $region65
  $region64: #{vae_basic_model_forward.1} parent=0 // pred_region
    _
  $region65: #{vae_basic_model_forward.1} parent=0 // pred_fallthru
    _
  %v53 = vld [vmem:[%s0] sm:$0xff]
  %v54 = vld [vmem:[%s4] sm:$0xff]
  %v55 = vld [vmem:[%s4 + $0x8] sm:$0xff]
  %v56 = vld [vmem:[%s4 + $0x10] sm:$0xff]
  %vm57 = vcmask 195584
  %v59 = vsel %vm57, %v53, 0
  %61 = vmatprep.subr.mxu0 0.0
  %62 = vmatpush1.msra.mxu0 %v54
  %63 = vmatprep.subr.mxu0 0.0
  %64 = vmatpush1.msra.mxu0 %v55
  %65 = vmatprep.subr.mxu0 0.0
  %66 = vmatpush1.msra.mxu0 %v56
  %67 = vmatprep.subr.mxu0 0.0
  %68 = vmatpush1.msra.mxu0 0.0
  %69 = vmatprep.subr.mxu0 0.0
  %70 = vmatpush1.msra.mxu0 0.0
  %71 = vmatprep.subr.mxu0 0.0
  %72 = vmatpush1.msra.mxu0 0.0
  %73 = vmatprep.subr.mxu0 0.0
  %74 = vmatpush1.msra.mxu0 0.0
  %75 = vmatprep.subr.mxu0 0.0
  %76 = vmatpush1.msra.mxu0 0.0
  %77 = vmatprep.subr.mxu0 0.0
  %78 = vmatpush1.msra.mxu0 0.0
  %79 = vmatprep.subr.mxu0 0.0
  %80 = vmatpush1.msra.mxu0 0.0
  %81 = vmatprep.subr.mxu0 0.0
  %82 = vmatpush1.msra.mxu0 0.0
  %83 = vmatprep.subr.mxu0 0.0
  %84 = vmatpush1.msra.mxu0 0.0
  %85 = vmatprep.subr.mxu0 0.0
  %86 = vmatpush1.msra.mxu0 0.0
  %87 = vmatprep.subr.mxu0 0.0
  %88 = vmatpush1.msra.mxu0 0.0
  %89 = vmatprep.subr.mxu0 0.0
  %90 = vmatpush1.msra.mxu0 0.0
  %91 = vmatprep.subr.mxu0 0.0
  %92 = vmatpush1.msra.mxu0 0.0
  %93 = vmatprep.subr.mxu0 0.0
  %94 = vmatpush1.msra.mxu0 0.0
  %95 = vmatprep.subr.mxu0 0.0
  %96 = vmatpush1.msra.mxu0 0.0
  %97 = vmatprep.subr.mxu0 0.0
  %98 = vmatpush1.msra.mxu0 0.0
  %99 = vmatprep.subr.mxu0 0.0
  %100 = vmatpush1.msra.mxu0 0.0
  %101 = vmatprep.subr.mxu0 0.0
  %102 = vmatpush1.msra.mxu0 0.0
  %103 = vmatprep.subr.mxu0 0.0
  %104 = vmatpush1.msra.mxu0 0.0
  %105 = vmatprep.subr.mxu0 0.0
  %106 = vmatpush1.msra.mxu0 0.0
  %107 = vmatprep.subr.mxu0 0.0
  %108 = vmatpush1.msra.mxu0 0.0
  %109 = vmatprep.subr.mxu0 0.0
  %110 = vmatpush1.msra.mxu0 0.0
  %111 = vmatprep.subr.mxu0 0.0
  %112 = vmatpush1.msra.mxu0 0.0
  %113 = vmatprep.subr.mxu0 0.0
  %114 = vmatpush1.msra.mxu0 0.0
  %115 = vmatprep.subr.mxu0 0.0
  %116 = vmatpush1.msra.mxu0 0.0
  %117 = vmatprep.subr.mxu0 0.0
  %118 = vmatpush1.msra.mxu0 0.0
  %119 = vmatprep.subr.mxu0 0.0
  %120 = vmatpush1.msra.mxu0 0.0
  %121 = vmatprep.subr.mxu0 0.0
  %122 = vmatpush1.msra.mxu0 0.0
  %123 = vmatprep.subr.mxu0 0.0
  %124 = vmatpush1.msra.mxu0 0.0
  %125 = vmatprep.mubr.f32.mxu0 0.0
  %126 = vmatmul.mubr.f32.gmra.mrb[0].mxu0 %v59
  %v127 = vpop.f32.mrb[0].mxu0
  %v128 = vadd.f32 0.0, %v127
  %v129 = vpop.f32.mrb[0].mxu0
  %130 = vdwg.mxu0
  %v131 = vld [vmem:[%s1] sm:$0xff]
  %v132 = vld [vmem:[%s5] sm:$0xff]
  %v133 = vld [vmem:[%s5 + $0x8] sm:$0xff]
  %vm134 = vcmask 130048
  %v136 = vsel %vm134, %v131, 0
  %138 = vmatprep.subr.mxu0 0.0
  %139 = vmatpush1.msra.mxu0 %v132
  %140 = vmatprep.subr.mxu0 0.0
  %141 = vmatpush1.msra.mxu0 %v133
  %142 = vmatprep.subr.mxu0 0.0
  %143 = vmatpush1.msra.mxu0 0.0
  %144 = vmatprep.subr.mxu0 0.0
  %145 = vmatpush1.msra.mxu0 0.0
  %146 = vmatprep.subr.mxu0 0.0
  %147 = vmatpush1.msra.mxu0 0.0
  %148 = vmatprep.subr.mxu0 0.0
  %149 = vmatpush1.msra.mxu0 0.0
  %150 = vmatprep.subr.mxu0 0.0
  %151 = vmatpush1.msra.mxu0 0.0
  %152 = vmatprep.subr.mxu0 0.0
  %153 = vmatpush1.msra.mxu0 0.0
  %154 = vmatprep.subr.mxu0 0.0
  %155 = vmatpush1.msra.mxu0 0.0
  %156 = vmatprep.subr.mxu0 0.0
  %157 = vmatpush1.msra.mxu0 0.0
  %158 = vmatprep.subr.mxu0 0.0
  %159 = vmatpush1.msra.mxu0 0.0
  %160 = vmatprep.subr.mxu0 0.0
  %161 = vmatpush1.msra.mxu0 0.0
  %162 = vmatprep.subr.mxu0 0.0
  %163 = vmatpush1.msra.mxu0 0.0
  %164 = vmatprep.subr.mxu0 0.0
  %165 = vmatpush1.msra.mxu0 0.0
  %166 = vmatprep.subr.mxu0 0.0
  %167 = vmatpush1.msra.mxu0 0.0
  %168 = vmatprep.subr.mxu0 0.0
  %169 = vmatpush1.msra.mxu0 0.0
  %170 = vmatprep.subr.mxu0 0.0
  %171 = vmatpush1.msra.mxu0 0.0
  %172 = vmatprep.subr.mxu0 0.0
  %173 = vmatpush1.msra.mxu0 0.0
  %174 = vmatprep.subr.mxu0 0.0
  %175 = vmatpush1.msra.mxu0 0.0
  %176 = vmatprep.subr.mxu0 0.0
  %177 = vmatpush1.msra.mxu0 0.0
  %178 = vmatprep.subr.mxu0 0.0
  %179 = vmatpush1.msra.mxu0 0.0
  %180 = vmatprep.subr.mxu0 0.0
  %181 = vmatpush1.msra.mxu0 0.0
  %182 = vmatprep.subr.mxu0 0.0
  %183 = vmatpush1.msra.mxu0 0.0
  %184 = vmatprep.subr.mxu0 0.0
  %185 = vmatpush1.msra.mxu0 0.0
  %186 = vmatprep.subr.mxu0 0.0
  %187 = vmatpush1.msra.mxu0 0.0
  %188 = vmatprep.subr.mxu0 0.0
  %189 = vmatpush1.msra.mxu0 0.0
  %190 = vmatprep.subr.mxu0 0.0
  %191 = vmatpush1.msra.mxu0 0.0
  %192 = vmatprep.subr.mxu0 0.0
  %193 = vmatpush1.msra.mxu0 0.0
  %194 = vmatprep.subr.mxu0 0.0
  %195 = vmatpush1.msra.mxu0 0.0
  %196 = vmatprep.subr.mxu0 0.0
  %197 = vmatpush1.msra.mxu0 0.0
  %198 = vmatprep.subr.mxu0 0.0
  %199 = vmatpush1.msra.mxu0 0.0
  %200 = vmatprep.subr.mxu0 0.0
  %201 = vmatpush1.msra.mxu0 0.0
  %202 = vmatprep.mubr.f32.mxu0 0.0
  %203 = vmatmul.mubr.f32.gmra.mrb[0].mxu0 %v136
  %v204 = vpop.f32.mrb[0].mxu0
  %v205 = vadd.f32 0.0, %v204
  %v206 = vpop.f32.mrb[0].mxu0
  %207 = vdwg.mxu0
  %v208 = vld [vmem:[%s2] sm:$0xff]
  %v209 = vld [vmem:[%s6] sm:$0xff]
  %v210 = vld [vmem:[%s6 + $0x8] sm:$0xff]
  %v211 = vld [vmem:[%s6 + $0x10] sm:$0xf]
  %vm212 = vcmask 162816
  %v214 = vsel %vm212, %v208, 0
  %vm216 = vcmask 1043456
  %v218 = vsel %vm216, %v211, 0
  %220 = vmatprep.subr.mxu0 0.0
  %221 = vmatpush1.msra.mxu0 %v209
  %222 = vmatprep.subr.mxu0 0.0
  %223 = vmatpush1.msra.mxu0 %v210
  %224 = vmatprep.subr.mxu0 0.0
  %225 = vmatpush1.msra.mxu0 %v218
  %226 = vmatprep.subr.mxu0 0.0
  %227 = vmatpush1.msra.mxu0 0.0
  %228 = vmatprep.subr.mxu0 0.0
  %229 = vmatpush1.msra.mxu0 0.0
  %230 = vmatprep.subr.mxu0 0.0
  %231 = vmatpush1.msra.mxu0 0.0
  %232 = vmatprep.subr.mxu0 0.0
  %233 = vmatpush1.msra.mxu0 0.0
  %234 = vmatprep.subr.mxu0 0.0
  %235 = vmatpush1.msra.mxu0 0.0
  %236 = vmatprep.subr.mxu0 0.0
  %237 = vmatpush1.msra.mxu0 0.0
  %238 = vmatprep.subr.mxu0 0.0
  %239 = vmatpush1.msra.mxu0 0.0
  %240 = vmatprep.subr.mxu0 0.0
  %241 = vmatpush1.msra.mxu0 0.0
  %242 = vmatprep.subr.mxu0 0.0
  %243 = vmatpush1.msra.mxu0 0.0
  %244 = vmatprep.subr.mxu0 0.0
  %245 = vmatpush1.msra.mxu0 0.0
  %246 = vmatprep.subr.mxu0 0.0
  %247 = vmatpush1.msra.mxu0 0.0
  %248 = vmatprep.subr.mxu0 0.0
  %249 = vmatpush1.msra.mxu0 0.0
  %250 = vmatprep.subr.mxu0 0.0
  %251 = vmatpush1.msra.mxu0 0.0
  %252 = vmatprep.subr.mxu0 0.0
  %253 = vmatpush1.msra.mxu0 0.0
  %254 = vmatprep.subr.mxu0 0.0
  %255 = vmatpush1.msra.mxu0 0.0
  %256 = vmatprep.subr.mxu0 0.0
  %257 = vmatpush1.msra.mxu0 0.0
  %258 = vmatprep.subr.mxu0 0.0
  %259 = vmatpush1.msra.mxu0 0.0
  %260 = vmatprep.subr.mxu0 0.0
  %261 = vmatpush1.msra.mxu0 0.0
  %262 = vmatprep.subr.mxu0 0.0
  %263 = vmatpush1.msra.mxu0 0.0
  %264 = vmatprep.subr.mxu0 0.0
  %265 = vmatpush1.msra.mxu0 0.0
  %266 = vmatprep.subr.mxu0 0.0
  %267 = vmatpush1.msra.mxu0 0.0
  %268 = vmatprep.subr.mxu0 0.0
  %269 = vmatpush1.msra.mxu0 0.0
  %270 = vmatprep.subr.mxu0 0.0
  %271 = vmatpush1.msra.mxu0 0.0
  %272 = vmatprep.subr.mxu0 0.0
  %273 = vmatpush1.msra.mxu0 0.0
  %274 = vmatprep.subr.mxu0 0.0
  %275 = vmatpush1.msra.mxu0 0.0
  %276 = vmatprep.subr.mxu0 0.0
  %277 = vmatpush1.msra.mxu0 0.0
  %278 = vmatprep.subr.mxu0 0.0
  %279 = vmatpush1.msra.mxu0 0.0
  %280 = vmatprep.subr.mxu0 0.0
  %281 = vmatpush1.msra.mxu0 0.0
  %282 = vmatprep.subr.mxu0 0.0
  %283 = vmatpush1.msra.mxu0 0.0
  %284 = vmatprep.mubr.f32.mxu0 0.0
  %285 = vmatmul.mubr.f32.gmra.mrb[0].mxu0 %v214
  %v286 = vpop.f32.mrb[0].mxu0
  %v287 = vadd.f32 0.0, %v286
  %v288 = vpop.f32.mrb[0].mxu0
  %289 = vdwg.mxu0
  %291 = vrot.lane.b32.xlu0 %v205, 32
  %v292 = vpop.permute.xlu0 %291
  %295 = vrot.lane.b32.xlu0 %v287, 64
  %v296 = vpop.permute.xlu0 %295
  %vm298 = vcmask 261120
  %v299 = vsel %vm298, %v128, %v292
  %vm300 = vcmask 523264
  %v301 = vsel %vm300, %v299, %v296
  %v302 = vld [vmem:[%s7] sm:$0x3]
  %vm303 = vcmask 785408
  %v304 = vsel %vm303, %v301, 0.0
  %v305 = vrot.slane %v304, 4
  %v306 = vadd.f32 %v304, %v305
  %v307 = vrot.slane %v306, 2
  %v308 = vadd.f32 %v306, %v307
  %v309 = vrot.slane %v308, 1
  %v310 = vadd.f32 %v308, %v309
  %v311 = vrcp.pop 8.0
  %v312 = vmul.f32 %v310, %v311
  %v313 = vsub.f32 %v301, %v312
  %v314 = vmul.f32 %v313, %v313
  %v315 = vsel %vm303, %v314, 0.0
  %v316 = vrot.slane %v315, 4
  %v317 = vadd.f32 %v315, %v316
  %v318 = vrot.slane %v317, 2
  %v319 = vadd.f32 %v317, %v318
  %v320 = vrot.slane %v319, 1
  %v321 = vadd.f32 %v319, %v320
  %v322 = vmul.f32 %v321, %v311
  %v323 = vadd.f32 %v322, 1e-05
  %v324 = vrsqrt.pop %v323
  %v325 = vmul.f32 %v324, %v302
  %v326 = vlaneseq
  %v327 = vshrl.u32 %v326, 7
  %v328 = vsub.s32 0, %v327
  %v329 = vrot.slane %v325, %v328
  %v330 = vmul.f32 %v313, %v329
  %v331 = vlaneseq
  %v332 = vshrl.u32 %v331, 7
  %v333 = vsub.s32 1, %v332
  %v334 = vrot.slane %v302, %v333
  %v335 = vadd.f32 %v330, %v334
  %vm336 = vcmp.ge.f32.partialorder %v335, 0.0
  %v337 = vmul.f32 %v335, 0.2
  %v338 = vsel %vm336, %v335, %v337
  %v339 = vld [vmem:[%s8] sm:$0xff]
  %v340 = vld [vmem:[%s8 + $0x8] sm:$0xff]
  %v341 = vld [vmem:[%s8 + $0x10] sm:$0xff]
  %v342 = vld [vmem:[%s8 + $0x18] sm:$0xff]
  %v343 = vld [vmem:[%s8 + $0x20] sm:$0xff]
  %v344 = vld [vmem:[%s8 + $0x28] sm:$0xff]
  %v345 = vld [vmem:[%s8 + $0x30] sm:$0xff]
  %v346 = vld [vmem:[%s8 + $0x38] sm:$0xff]
  %v347 = vld [vmem:[%s8 + $0x40] sm:$0xff]
  %v348 = vld [vmem:[%s8 + $0x48] sm:$0xff]
  %v349 = vld [vmem:[%s8 + $0x50] sm:$0xff]
  %v350 = vld [vmem:[%s8 + $0x58] sm:$0xff]
  %v351 = vld [vmem:[%s9] sm:$0x1]
  %v353 = vlaneseq
  %v354 = vshrl.u32 %v353, 7
  %v355 = vsub.s32 0, %v354
  %v356 = vrot.slane %v351, %v355
  %v359 = vsel %vm303, %v338, 0
  %361 = vmatprep.subr.mxu0 0.0
  %362 = vmatpush1.msra.mxu0 %v339
  %363 = vmatprep.subr.mxu0 0.0
  %364 = vmatpush1.msra.mxu0 %v340
  %365 = vmatprep.subr.mxu0 0.0
  %366 = vmatpush1.msra.mxu0 %v341
  %367 = vmatprep.subr.mxu0 0.0
  %368 = vmatpush1.msra.mxu0 %v342
  %369 = vmatprep.subr.mxu0 0.0
  %370 = vmatpush1.msra.mxu0 %v343
  %371 = vmatprep.subr.mxu0 0.0
  %372 = vmatpush1.msra.mxu0 %v344
  %373 = vmatprep.subr.mxu0 0.0
  %374 = vmatpush1.msra.mxu0 %v345
  %375 = vmatprep.subr.mxu0 0.0
  %376 = vmatpush1.msra.mxu0 %v346
  %377 = vmatprep.subr.mxu0 0.0
  %378 = vmatpush1.msra.mxu0 %v347
  %379 = vmatprep.subr.mxu0 0.0
  %380 = vmatpush1.msra.mxu0 %v348
  %381 = vmatprep.subr.mxu0 0.0
  %382 = vmatpush1.msra.mxu0 %v349
  %383 = vmatprep.subr.mxu0 0.0
  %384 = vmatpush1.msra.mxu0 %v350
  %385 = vmatprep.subr.mxu0 0.0
  %386 = vmatpush1.msra.mxu0 0.0
  %387 = vmatprep.subr.mxu0 0.0
  %388 = vmatpush1.msra.mxu0 0.0
  %389 = vmatprep.subr.mxu0 0.0
  %390 = vmatpush1.msra.mxu0 0.0
  %391 = vmatprep.subr.mxu0 0.0
  %392 = vmatpush1.msra.mxu0 0.0
  %393 = vmatprep.subr.mxu0 0.0
  %394 = vmatpush1.msra.mxu0 0.0
  %395 = vmatprep.subr.mxu0 0.0
  %396 = vmatpush1.msra.mxu0 0.0
  %397 = vmatprep.subr.mxu0 0.0
  %398 = vmatpush1.msra.mxu0 0.0
  %399 = vmatprep.subr.mxu0 0.0
  %400 = vmatpush1.msra.mxu0 0.0
  %401 = vmatprep.subr.mxu0 0.0
  %402 = vmatpush1.msra.mxu0 0.0
  %403 = vmatprep.subr.mxu0 0.0
  %404 = vmatpush1.msra.mxu0 0.0
  %405 = vmatprep.subr.mxu0 0.0
  %406 = vmatpush1.msra.mxu0 0.0
  %407 = vmatprep.subr.mxu0 0.0
  %408 = vmatpush1.msra.mxu0 0.0
  %409 = vmatprep.subr.mxu0 0.0
  %410 = vmatpush1.msra.mxu0 0.0
  %411 = vmatprep.subr.mxu0 0.0
  %412 = vmatpush1.msra.mxu0 0.0
  %413 = vmatprep.subr.mxu0 0.0
  %414 = vmatpush1.msra.mxu0 0.0
  %415 = vmatprep.subr.mxu0 0.0
  %416 = vmatpush1.msra.mxu0 0.0
  %417 = vmatprep.subr.mxu0 0.0
  %418 = vmatpush1.msra.mxu0 0.0
  %419 = vmatprep.subr.mxu0 0.0
  %420 = vmatpush1.msra.mxu0 0.0
  %421 = vmatprep.subr.mxu0 0.0
  %422 = vmatpush1.msra.mxu0 0.0
  %423 = vmatprep.subr.mxu0 0.0
  %424 = vmatpush1.msra.mxu0 0.0
  %425 = vmatprep.mubr.f32.mxu0 0.0
  %426 = vmatmul.mubr.f32.gmra.mrb[0].mxu0 %v359
  %v427 = vpop.f32.mrb[0].mxu0
  %v428 = vadd.f32 %v356, %v427
  %v429 = vpop.f32.mrb[0].mxu0
  %430 = vdwg.mxu0
  %v431 = vld [vmem:[%s3] sm:$0xff]
  %v432 = vmul.f32 %v428, 0.5
  %v433 = vmul.f32 %v432, 1.442695
  %v434 = vpow.pop %v433
  %436 = vrot.lane.b32.xlu0 %v434, 112
  %v437 = vpop.permute.xlu0 %436
  %v439 = vmul.f32 %v431, %v437
  %v440 = vadd.f32 %v439, %v428
  %v441 = vld [vmem:[%s10] sm:$0xff]
  %v442 = vld [vmem:[%s10 + $0x8] sm:$0xff]
  %v444 = vsel %vm134, %v440, 0
  %446 = vmatprep.subr.mxu0 0.0
  %447 = vmatpush1.msra.mxu0 %v441
  %448 = vmatprep.subr.mxu0 0.0
  %449 = vmatpush1.msra.mxu0 %v442
  %450 = vmatprep.subr.mxu0 0.0
  %451 = vmatpush1.msra.mxu0 0.0
  %452 = vmatprep.subr.mxu0 0.0
  %453 = vmatpush1.msra.mxu0 0.0
  %454 = vmatprep.subr.mxu0 0.0
  %455 = vmatpush1.msra.mxu0 0.0
  %456 = vmatprep.subr.mxu0 0.0
  %457 = vmatpush1.msra.mxu0 0.0
  %458 = vmatprep.subr.mxu0 0.0
  %459 = vmatpush1.msra.mxu0 0.0
  %460 = vmatprep.subr.mxu0 0.0
  %461 = vmatpush1.msra.mxu0 0.0
  %462 = vmatprep.subr.mxu0 0.0
  %463 = vmatpush1.msra.mxu0 0.0
  %464 = vmatprep.subr.mxu0 0.0
  %465 = vmatpush1.msra.mxu0 0.0
  %466 = vmatprep.subr.mxu0 0.0
  %467 = vmatpush1.msra.mxu0 0.0
  %468 = vmatprep.subr.mxu0 0.0
  %469 = vmatpush1.msra.mxu0 0.0
  %470 = vmatprep.subr.mxu0 0.0
  %471 = vmatpush1.msra.mxu0 0.0
  %472 = vmatprep.subr.mxu0 0.0
  %473 = vmatpush1.msra.mxu0 0.0
  %474 = vmatprep.subr.mxu0 0.0
  %475 = vmatpush1.msra.mxu0 0.0
  %476 = vmatprep.subr.mxu0 0.0
  %477 = vmatpush1.msra.mxu0 0.0
  %478 = vmatprep.subr.mxu0 0.0
  %479 = vmatpush1.msra.mxu0 0.0
  %480 = vmatprep.subr.mxu0 0.0
  %481 = vmatpush1.msra.mxu0 0.0
  %482 = vmatprep.subr.mxu0 0.0
  %483 = vmatpush1.msra.mxu0 0.0
  %484 = vmatprep.subr.mxu0 0.0
  %485 = vmatpush1.msra.mxu0 0.0
  %486 = vmatprep.subr.mxu0 0.0
  %487 = vmatpush1.msra.mxu0 0.0
  %488 = vmatprep.subr.mxu0 0.0
  %489 = vmatpush1.msra.mxu0 0.0
  %490 = vmatprep.subr.mxu0 0.0
  %491 = vmatpush1.msra.mxu0 0.0
  %492 = vmatprep.subr.mxu0 0.0
  %493 = vmatpush1.msra.mxu0 0.0
  %494 = vmatprep.subr.mxu0 0.0
  %495 = vmatpush1.msra.mxu0 0.0
  %496 = vmatprep.subr.mxu0 0.0
  %497 = vmatpush1.msra.mxu0 0.0
  %498 = vmatprep.subr.mxu0 0.0
  %499 = vmatpush1.msra.mxu0 0.0
  %500 = vmatprep.subr.mxu0 0.0
  %501 = vmatpush1.msra.mxu0 0.0
  %502 = vmatprep.subr.mxu0 0.0
  %503 = vmatpush1.msra.mxu0 0.0
  %504 = vmatprep.subr.mxu0 0.0
  %505 = vmatpush1.msra.mxu0 0.0
  %506 = vmatprep.subr.mxu0 0.0
  %507 = vmatpush1.msra.mxu0 0.0
  %508 = vmatprep.subr.mxu0 0.0
  %509 = vmatpush1.msra.mxu0 0.0
  %510 = vmatprep.mubr.f32.mxu0 0.0
  %511 = vmatmul.mubr.f32.gmra.mrb[0].mxu0 %v444
  %v512 = vpop.f32.mrb[0].mxu0
  %v513 = vadd.f32 0.0, %v512
  %v514 = vpop.f32.mrb[0].mxu0
  %515 = vdwg.mxu0
  %v516 = vld [vmem:[%s11] sm:$0x3]
  %v517 = vsel %vm303, %v513, 0.0
  %v518 = vrot.slane %v517, 4
  %v519 = vadd.f32 %v517, %v518
  %v520 = vrot.slane %v519, 2
  %v521 = vadd.f32 %v519, %v520
  %v522 = vrot.slane %v521, 1
  %v523 = vadd.f32 %v521, %v522
  %v524 = vmul.f32 %v523, %v311
  %v525 = vsub.f32 %v513, %v524
  %v526 = vmul.f32 %v525, %v525
  %v527 = vsel %vm303, %v526, 0.0
  %v528 = vrot.slane %v527, 4
  %v529 = vadd.f32 %v527, %v528
  %v530 = vrot.slane %v529, 2
  %v531 = vadd.f32 %v529, %v530
  %v532 = vrot.slane %v531, 1
  %v533 = vadd.f32 %v531, %v532
  %v534 = vmul.f32 %v533, %v311
  %v535 = vadd.f32 %v534, 1e-05
  %v536 = vrsqrt.pop %v535
  %v537 = vmul.f32 %v536, %v516
  %v538 = vlaneseq
  %v539 = vshrl.u32 %v538, 7
  %v540 = vsub.s32 0, %v539
  %v541 = vrot.slane %v537, %v540
  %v542 = vmul.f32 %v525, %v541
  %v543 = vlaneseq
  %v544 = vshrl.u32 %v543, 7
  %v545 = vsub.s32 1, %v544
  %v546 = vrot.slane %v516, %v545
  %v547 = vadd.f32 %v542, %v546
  %vm548 = vcmp.ge.f32.partialorder %v547, 0.0
  %v549 = vmul.f32 %v547, 0.2
  %v550 = vsel %vm548, %v547, %v549
  %v551 = vld [vmem:[%s12] sm:$0xff]
  %v552 = vld [vmem:[%s12 + $0x8] sm:$0xff]
  %v553 = vld [vmem:[%s12 + $0x10] sm:$0xff]
  %v554 = vld [vmem:[%s12 + $0x18] sm:$0xff]
  %v556 = vsel %vm298, %v550, 0
  %558 = vmatprep.subr.mxu0 0.0
  %559 = vmatpush1.msra.mxu0 %v551
  %560 = vmatprep.subr.mxu0 0.0
  %561 = vmatpush1.msra.mxu0 %v552
  %562 = vmatprep.subr.mxu0 0.0
  %563 = vmatpush1.msra.mxu0 %v553
  %564 = vmatprep.subr.mxu0 0.0
  %565 = vmatpush1.msra.mxu0 %v554
  %566 = vmatprep.subr.mxu0 0.0
  %567 = vmatpush1.msra.mxu0 0.0
  %568 = vmatprep.subr.mxu0 0.0
  %569 = vmatpush1.msra.mxu0 0.0
  %570 = vmatprep.subr.mxu0 0.0
  %571 = vmatpush1.msra.mxu0 0.0
  %572 = vmatprep.subr.mxu0 0.0
  %573 = vmatpush1.msra.mxu0 0.0
  %574 = vmatprep.subr.mxu0 0.0
  %575 = vmatpush1.msra.mxu0 0.0
  %576 = vmatprep.subr.mxu0 0.0
  %577 = vmatpush1.msra.mxu0 0.0
  %578 = vmatprep.subr.mxu0 0.0
  %579 = vmatpush1.msra.mxu0 0.0
  %580 = vmatprep.subr.mxu0 0.0
  %581 = vmatpush1.msra.mxu0 0.0
  %582 = vmatprep.subr.mxu0 0.0
  %583 = vmatpush1.msra.mxu0 0.0
  %584 = vmatprep.subr.mxu0 0.0
  %585 = vmatpush1.msra.mxu0 0.0
  %586 = vmatprep.subr.mxu0 0.0
  %587 = vmatpush1.msra.mxu0 0.0
  %588 = vmatprep.subr.mxu0 0.0
  %589 = vmatpush1.msra.mxu0 0.0
  %590 = vmatprep.subr.mxu0 0.0
  %591 = vmatpush1.msra.mxu0 0.0
  %592 = vmatprep.subr.mxu0 0.0
  %593 = vmatpush1.msra.mxu0 0.0
  %594 = vmatprep.subr.mxu0 0.0
  %595 = vmatpush1.msra.mxu0 0.0
  %596 = vmatprep.subr.mxu0 0.0
  %597 = vmatpush1.msra.mxu0 0.0
  %598 = vmatprep.subr.mxu0 0.0
  %599 = vmatpush1.msra.mxu0 0.0
  %600 = vmatprep.subr.mxu0 0.0
  %601 = vmatpush1.msra.mxu0 0.0
  %602 = vmatprep.subr.mxu0 0.0
  %603 = vmatpush1.msra.mxu0 0.0
  %604 = vmatprep.subr.mxu0 0.0
  %605 = vmatpush1.msra.mxu0 0.0
  %606 = vmatprep.subr.mxu0 0.0
  %607 = vmatpush1.msra.mxu0 0.0
  %608 = vmatprep.subr.mxu0 0.0
  %609 = vmatpush1.msra.mxu0 0.0
  %610 = vmatprep.subr.mxu0 0.0
  %611 = vmatpush1.msra.mxu0 0.0
  %612 = vmatprep.subr.mxu0 0.0
  %613 = vmatpush1.msra.mxu0 0.0
  %614 = vmatprep.subr.mxu0 0.0
  %615 = vmatpush1.msra.mxu0 0.0
  %616 = vmatprep.subr.mxu0 0.0
  %617 = vmatpush1.msra.mxu0 0.0
  %618 = vmatprep.subr.mxu0 0.0
  %619 = vmatpush1.msra.mxu0 0.0
  %620 = vmatprep.subr.mxu0 0.0
  %621 = vmatpush1.msra.mxu0 0.0
  %622 = vmatprep.mubr.f32.mxu0 0.0
  %623 = vmatmul.mubr.f32.gmra.mrb[0].mxu0 %v556
  %v624 = vpop.f32.mrb[0].mxu0
  %v625 = vadd.f32 0.0, %v624
  %v626 = vpop.f32.mrb[0].mxu0
  %627 = vdwg.mxu0
  %v628 = vld [vmem:[%s13] sm:$0xff]
  %v629 = vld [vmem:[%s13 + $0x8] sm:$0xff]
  %v630 = vld [vmem:[%s13 + $0x10] sm:$0xff]
  %v631 = vld [vmem:[%s13 + $0x18] sm:$0xff]
  %632 = vrot.lane.b32.xlu0 %v550, 96
  %v633 = vpop.permute.xlu0 %632
  %v634 = vsel %vm298, %v633, 0
  %636 = vmatprep.subr.mxu0 0.0
  %637 = vmatpush1.msra.mxu0 %v628
  %638 = vmatprep.subr.mxu0 0.0
  %639 = vmatpush1.msra.mxu0 %v629
  %640 = vmatprep.subr.mxu0 0.0
  %641 = vmatpush1.msra.mxu0 %v630
  %642 = vmatprep.subr.mxu0 0.0
  %643 = vmatpush1.msra.mxu0 %v631
  %644 = vmatprep.subr.mxu0 0.0
  %645 = vmatpush1.msra.mxu0 0.0
  %646 = vmatprep.subr.mxu0 0.0
  %647 = vmatpush1.msra.mxu0 0.0
  %648 = vmatprep.subr.mxu0 0.0
  %649 = vmatpush1.msra.mxu0 0.0
  %650 = vmatprep.subr.mxu0 0.0
  %651 = vmatpush1.msra.mxu0 0.0
  %652 = vmatprep.subr.mxu0 0.0
  %653 = vmatpush1.msra.mxu0 0.0
  %654 = vmatprep.subr.mxu0 0.0
  %655 = vmatpush1.msra.mxu0 0.0
  %656 = vmatprep.subr.mxu0 0.0
  %657 = vmatpush1.msra.mxu0 0.0
  %658 = vmatprep.subr.mxu0 0.0
  %659 = vmatpush1.msra.mxu0 0.0
  %660 = vmatprep.subr.mxu0 0.0
  %661 = vmatpush1.msra.mxu0 0.0
  %662 = vmatprep.subr.mxu0 0.0
  %663 = vmatpush1.msra.mxu0 0.0
  %664 = vmatprep.subr.mxu0 0.0
  %665 = vmatpush1.msra.mxu0 0.0
  %666 = vmatprep.subr.mxu0 0.0
  %667 = vmatpush1.msra.mxu0 0.0
  %668 = vmatprep.subr.mxu0 0.0
  %669 = vmatpush1.msra.mxu0 0.0
  %670 = vmatprep.subr.mxu0 0.0
  %671 = vmatpush1.msra.mxu0 0.0
  %672 = vmatprep.subr.mxu0 0.0
  %673 = vmatpush1.msra.mxu0 0.0
  %674 = vmatprep.subr.mxu0 0.0
  %675 = vmatpush1.msra.mxu0 0.0
  %676 = vmatprep.subr.mxu0 0.0
  %677 = vmatpush1.msra.mxu0 0.0
  %678 = vmatprep.subr.mxu0 0.0
  %679 = vmatpush1.msra.mxu0 0.0
  %680 = vmatprep.subr.mxu0 0.0
  %681 = vmatpush1.msra.mxu0 0.0
  %682 = vmatprep.subr.mxu0 0.0
  %683 = vmatpush1.msra.mxu0 0.0
  %684 = vmatprep.subr.mxu0 0.0
  %685 = vmatpush1.msra.mxu0 0.0
  %686 = vmatprep.subr.mxu0 0.0
  %687 = vmatpush1.msra.mxu0 0.0
  %688 = vmatprep.subr.mxu0 0.0
  %689 = vmatpush1.msra.mxu0 0.0
  %690 = vmatprep.subr.mxu0 0.0
  %691 = vmatpush1.msra.mxu0 0.0
  %692 = vmatprep.subr.mxu0 0.0
  %693 = vmatpush1.msra.mxu0 0.0
  %694 = vmatprep.subr.mxu0 0.0
  %695 = vmatpush1.msra.mxu0 0.0
  %696 = vmatprep.subr.mxu0 0.0
  %697 = vmatpush1.msra.mxu0 0.0
  %698 = vmatprep.subr.mxu0 0.0
  %699 = vmatpush1.msra.mxu0 0.0
  %700 = vmatprep.mubr.f32.mxu0 0.0
  %701 = vmatmul.mubr.f32.gmra.mrb[0].mxu0 %v634
  %v702 = vpop.f32.mrb[0].mxu0
  %v703 = vadd.f32 0.0, %v702
  %v704 = vpop.f32.mrb[0].mxu0
  %705 = vdwg.mxu0
  %v706 = vld [vmem:[%s14] sm:$0xff]
  %v707 = vld [vmem:[%s14 + $0x8] sm:$0xff]
  %v708 = vld [vmem:[%s14 + $0x10] sm:$0xff]
  %v709 = vld [vmem:[%s14 + $0x18] sm:$0xff]
  %710 = vrot.lane.b32.xlu0 %v550, 64
  %v711 = vpop.permute.xlu0 %710
  %v712 = vsel %vm298, %v711, 0
  %714 = vmatprep.subr.mxu0 0.0
  %715 = vmatpush1.msra.mxu0 %v706
  %716 = vmatprep.subr.mxu0 0.0
  %717 = vmatpush1.msra.mxu0 %v707
  %718 = vmatprep.subr.mxu0 0.0
  %719 = vmatpush1.msra.mxu0 %v708
  %720 = vmatprep.subr.mxu0 0.0
  %721 = vmatpush1.msra.mxu0 %v709
  %722 = vmatprep.subr.mxu0 0.0
  %723 = vmatpush1.msra.mxu0 0.0
  %724 = vmatprep.subr.mxu0 0.0
  %725 = vmatpush1.msra.mxu0 0.0
  %726 = vmatprep.subr.mxu0 0.0
  %727 = vmatpush1.msra.mxu0 0.0
  %728 = vmatprep.subr.mxu0 0.0
  %729 = vmatpush1.msra.mxu0 0.0
  %730 = vmatprep.subr.mxu0 0.0
  %731 = vmatpush1.msra.mxu0 0.0
  %732 = vmatprep.subr.mxu0 0.0
  %733 = vmatpush1.msra.mxu0 0.0
  %734 = vmatprep.subr.mxu0 0.0
  %735 = vmatpush1.msra.mxu0 0.0
  %736 = vmatprep.subr.mxu0 0.0
  %737 = vmatpush1.msra.mxu0 0.0
  %738 = vmatprep.subr.mxu0 0.0
  %739 = vmatpush1.msra.mxu0 0.0
  %740 = vmatprep.subr.mxu0 0.0
  %741 = vmatpush1.msra.mxu0 0.0
  %742 = vmatprep.subr.mxu0 0.0
  %743 = vmatpush1.msra.mxu0 0.0
  %744 = vmatprep.subr.mxu0 0.0
  %745 = vmatpush1.msra.mxu0 0.0
  %746 = vmatprep.subr.mxu0 0.0
  %747 = vmatpush1.msra.mxu0 0.0
  %748 = vmatprep.subr.mxu0 0.0
  %749 = vmatpush1.msra.mxu0 0.0
  %750 = vmatprep.subr.mxu0 0.0
  %751 = vmatpush1.msra.mxu0 0.0
  %752 = vmatprep.subr.mxu0 0.0
  %753 = vmatpush1.msra.mxu0 0.0
  %754 = vmatprep.subr.mxu0 0.0
  %755 = vmatpush1.msra.mxu0 0.0
  %756 = vmatprep.subr.mxu0 0.0
  %757 = vmatpush1.msra.mxu0 0.0
  %758 = vmatprep.subr.mxu0 0.0
  %759 = vmatpush1.msra.mxu0 0.0
  %760 = vmatprep.subr.mxu0 0.0
  %761 = vmatpush1.msra.mxu0 0.0
  %762 = vmatprep.subr.mxu0 0.0
  %763 = vmatpush1.msra.mxu0 0.0
  %764 = vmatprep.subr.mxu0 0.0
  %765 = vmatpush1.msra.mxu0 0.0
  %766 = vmatprep.subr.mxu0 0.0
  %767 = vmatpush1.msra.mxu0 0.0
  %768 = vmatprep.subr.mxu0 0.0
  %769 = vmatpush1.msra.mxu0 0.0
  %770 = vmatprep.subr.mxu0 0.0
  %771 = vmatpush1.msra.mxu0 0.0
  %772 = vmatprep.subr.mxu0 0.0
  %773 = vmatpush1.msra.mxu0 0.0
  %774 = vmatprep.subr.mxu0 0.0
  %775 = vmatpush1.msra.mxu0 0.0
  %776 = vmatprep.subr.mxu0 0.0
  %777 = vmatpush1.msra.mxu0 0.0
  %778 = vmatprep.mubr.f32.mxu0 0.0
  %779 = vmatmul.mubr.f32.gmra.mrb[0].mxu0 %v712
  %v780 = vpop.f32.mrb[0].mxu0
  %v781 = vadd.f32 0.0, %v780
  %v782 = vpop.f32.mrb[0].mxu0
  %783 = vdwg.mxu0
  %785 = vrot.lane.b32.xlu0 %v703, 24
  %v786 = vpop.permute.xlu0 %785
  %789 = vrot.lane.b32.xlu0 %v781, 40
  %v790 = vpop.permute.xlu0 %789
  %v792 = vsel %vm57, %v625, %v786
  %vm793 = vcmask 326656
  %v794 = vsel %vm793, %v792, %v790
  %v795 = vld [vmem:[%s15] sm:$0x1]
  %v797 = vlaneseq
  %v798 = vshrl.u32 %v797, 7
  %v799 = vsub.s32 0, %v798
  %v800 = vrot.slane %v795, %v799
  %v802 = vadd.f32 %v794, %v800
  %803 = vrot.lane.b32.xlu0 %v440, 32
  %v804 = vpop.permute.xlu0 %803
  %807 = vrot.lane.b32.xlu0 %v802, 48
  %v808 = vpop.permute.xlu0 %807
  %v810 = vsel %vm298, %v428, %v804
  %vm811 = vcmask 392192
  %v812 = vsel %vm811, %v810, %v808
  %vm813 = vcmask 883712
  %814 = vst.msk [vmem:[%s16] sm:$0xff] %vm813, %v812
  // Predicated region
  $region66: #{vae_basic_model_forward.1} parent=0 // pred_check
    _
  $region67: #{vae_basic_model_forward.1} parent=0 // pred_check_branch
    %816 = sbr.rel (0) target = $region69
  $region68: #{vae_basic_model_forward.1} parent=0 // pred_region
    _
  $region69: #{vae_basic_model_forward.1} parent=0 // pred_fallthru
    _
  // Predicated region
  $region70: #{vae_basic_model_forward.1} parent=0 // pred_check
    _
  $region71: #{vae_basic_model_forward.1} parent=0 // pred_check_branch
    %818 = sbr.rel (0) target = $region73
  $region72: #{vae_basic_model_forward.1} parent=0 // pred_region
    _
  $region73: #{vae_basic_model_forward.1} parent=0 // pred_fallthru
    _

</llo_original>
